<compile_context>
chip_gen: v6e
topology: v6e:2x2x1
jax: 0.10.0
libtpu: 0.0.40
codegen_flags: <defaults>
</compile_context>

<pallas_src>
import math

import jax
import jax.numpy as jnp
from jax.experimental import pallas as pl
from jax.experimental.pallas import tpu as pltpu

DEGREES_OF_FREEDOM = 3
FEAT = 2 * DEGREES_OF_FREEDOM   # 6
FPAD = 8                        # f32 sublane tile (layer-1 contraction pad)
HIDDEN = 100
HPAD = 128                      # lane tile (hidden dim pad)


def _round_up(n, m):
    return ((n + m - 1) // m) * m


def _softplus(v):
    # matches torch.nn.Softplus(beta=1, threshold=20)
    return jnp.where(v > 20.0, v, jnp.log1p(jnp.exp(jnp.minimum(v, 20.0))))


def _kernel(x_ref, w1_ref, b1_ref, w2_ref, b2_ref, w3_ref, b3_ref,
            wc_ref, out_ref):
    # x_ref: (tb, FPAD)   w1: (FPAD, HPAD)   w2/w3: (HPAD, HPAD)
    # b1..b3, wc: (1, HPAD)                  out_ref: (1, 8, HPAD)
    x = x_ref[...]

    # first_layer: Linear(6,100) + Softplus (padded rows/cols are zero -> exact)
    h = _softplus(
        jnp.dot(x, w1_ref[...], preferred_element_type=jnp.float32) + b1_ref[...]
    )
    # x = x + general_layer1(x)
    h = h + (
        jnp.dot(_softplus(h), w2_ref[...], preferred_element_type=jnp.float32)
        + b2_ref[...]
    )
    # x = x + general_layer2(x)
    h = h + (
        jnp.dot(_softplus(h), w3_ref[...], preferred_element_type=jnp.float32)
        + b3_ref[...]
    )

    # Fused epilogue: per-row contribution of l.sum() (excluding the 100*b4
    # term, added in the wrapper) is h . (1 + 100*w4) over the valid lanes.
    # wc's padded lanes are exactly 0, so no lane masking is needed; padded
    # batch rows contribute a constant corrected in the wrapper.
    partial = jnp.sum(h * wc_ref[...])
    out_ref[...] = jnp.broadcast_to(partial, out_ref.shape)


def init_params(key, dof=DEGREES_OF_FREEDOM):
    """Deterministic nn.Linear-style init in torch layout: W (out,in), b (out,)."""
    shapes = [(HIDDEN, 2 * dof), (HIDDEN, HIDDEN), (HIDDEN, HIDDEN), (1, HIDDEN)]
    params = []
    for out_f, in_f in shapes:
        key, kw, kb = jax.random.split(key, 3)
        bound = 1.0 / math.sqrt(in_f)
        w = jax.random.uniform(kw, (out_f, in_f), jnp.float32, -bound, bound)
        b = jax.random.uniform(kb, (out_f,), jnp.float32, -bound, bound)
        params += [w, b]
    return params


def prepare_params(raw_params):
    """One-time padding / transposition of the weights (hoisted out of the hot path).

    Invariant relied upon by the kernel/wrapper: all padded rows/cols of the
    prepared weights and the padded lanes of the biases / wc are EXACTLY zero.
    """
    w1, b1, w2, b2, w3, b3, w4, b4 = raw_params
    f = w1.shape[1]
    w1p = jnp.zeros((FPAD, HPAD), jnp.float32).at[:f, :HIDDEN].set(w1.T)
    b1p = jnp.zeros((1, HPAD), jnp.float32).at[0, :HIDDEN].set(b1)
    w2p = jnp.zeros((HPAD, HPAD), jnp.float32).at[:HIDDEN, :HIDDEN].set(w2.T)
    b2p = jnp.zeros((1, HPAD), jnp.float32).at[0, :HIDDEN].set(b2)
    w3p = jnp.zeros((HPAD, HPAD), jnp.float32).at[:HIDDEN, :HIDDEN].set(w3.T)
    b3p = jnp.zeros((1, HPAD), jnp.float32).at[0, :HIDDEN].set(b3)
    # Fused epilogue weight: wc = 1 + 100*w4 on valid lanes, 0 on padded lanes.
    wc = jnp.zeros((1, HPAD), jnp.float32).at[0, :HIDDEN].set(
        1.0 + float(HIDDEN) * w4[0])
    b4s = jnp.asarray(b4[0], jnp.float32)

    # Contribution of one all-zero (batch-padding) input row; lets the kernel
    # skip row masking entirely (subtracted once per padded row in the wrapper).
    h0 = _softplus(b1)
    h0 = h0 + (_softplus(h0) @ w2.T + b2)
    h0 = h0 + (_softplus(h0) @ w3.T + b3)
    zero_row_partial = jnp.sum(h0 * (1.0 + float(HIDDEN) * w4[0]))

    return (w1p, b1p, w2p, b2p, w3p, b3p, wc, b4s, zero_row_partial)


def neural_network_forward(x, prepared, *, tb_max=2048):
    """Pallas forward pass; returns a scalar (matching `return l.sum()`)."""
    if x.ndim < 2:
        x = x[None, :]
    x = x.astype(jnp.float32)
    B, F = x.shape
    w1p, b1p, w2p, b2p, w3p, b3p, wc, b4s, zero_row_partial = prepared

    # Batch tile: multiple of 8 sublanes; pick ~B/2 so the parallel grid has
    # >=2 blocks whenever B allows it (v7x 2-TC sharding), capped at tb_max
    # to stay well inside scoped VMEM on every generation.
    tb = max(8, min(tb_max, _round_up(-(-B // 2), 8)))
    b_pad = _round_up(B, tb)
    nblk = b_pad // tb
    n_pad_rows = b_pad - B

    # Only per-call O(B) work: 6->8 feature pad + final partial batch-tile pad.
    x_p = jnp.zeros((b_pad, FPAD), jnp.float32).at[:B, :F].set(x)

    cost = pl.CostEstimate(
        flops=2 * b_pad * HPAD * (FPAD + 2 * HPAD + 1),
        transcendentals=6 * b_pad * HPAD,  # 3 softplus sites x (exp + log1p)
        bytes_accessed=4 * (x_p.size + w1p.size + w2p.size + w3p.size
                            + 4 * HPAD + nblk * 8 * HPAD),
    )

    grid_spec = pltpu.PrefetchScalarGridSpec(
        num_scalar_prefetch=0,
        grid=(nblk,),
        in_specs=[
            pl.BlockSpec((tb, FPAD), lambda i: (i, 0)),      # x: streamed per block
            pl.BlockSpec((FPAD, HPAD), lambda i: (0, 0)),    # weights stay resident
            pl.BlockSpec((1, HPAD), lambda i: (0, 0)),
            pl.BlockSpec((HPAD, HPAD), lambda i: (0, 0)),
            pl.BlockSpec((1, HPAD), lambda i: (0, 0)),
            pl.BlockSpec((HPAD, HPAD), lambda i: (0, 0)),
            pl.BlockSpec((1, HPAD), lambda i: (0, 0)),
            pl.BlockSpec((1, HPAD), lambda i: (0, 0)),
        ],
        out_specs=pl.BlockSpec((1, 8, HPAD), lambda i: (i, 0, 0)),
    )

    partials = pl.pallas_call(
        _kernel,
        out_shape=jax.ShapeDtypeStruct((nblk, 8, HPAD), jnp.float32),
        grid_spec=grid_spec,
        compiler_params=pltpu.CompilerParams(
            dimension_semantics=("parallel",),
            vmem_limit_bytes=32 * 1024 * 1024),
        cost_estimate=cost,
    )(x_p, w1p, b1p, w2p, b2p, w3p, b3p, wc)

    # l.sum() = sum(block partials) - n_pad_rows*zero_row_partial + 100*B*b4
    total = jnp.sum(partials[:, 0, 0])
    return (total
            - float(n_pad_rows) * zero_row_partial
            + float(HIDDEN) * B * b4s)


def reference_forward(x, raw_params):
    """Pure-JAX reference mirroring the PyTorch forward exactly."""
    if x.ndim < 2:
        x = x[None, :]
    w1, b1, w2, b2, w3, b3, w4, b4 = raw_params
    sp = jax.nn.softplus
    h = sp(x @ w1.T + b1)
    h = h + (sp(h) @ w2.T + b2)
    h = h + (sp(h) @ w3.T + b3)
    l = h + (h @ w4.T + b4)
    return jnp.sum(l)


if __name__ == "__main__":
    key = jax.random.PRNGKey(0)
    k_params, k_x1, k_x2, k_x3 = jax.random.split(key, 4)

    raw_params = init_params(k_params)
    prepared = prepare_params(raw_params)

    # Small batch, feature dim = 2 * DEGREES_OF_FREEDOM = 6 (single grid block).
    x1 = jax.random.normal(k_x1, (8, FEAT), dtype=jnp.float32)
    out1 = jax.block_until_ready(neural_network_forward(x1, prepared))
    ref1 = reference_forward(x1, raw_params)
    assert out1.shape == (), f"expected scalar, got {out1.shape}"
    assert jnp.allclose(out1, ref1, rtol=1e-4, atol=1e-3), (out1, ref1)

    # Multi-block grid + zero-row correction path (B=40 not a multiple of tb=16).
    x2 = jax.random.normal(k_x2, (40, FEAT), dtype=jnp.float32)
    out2 = jax.block_until_ready(neural_network_forward(x2, prepared, tb_max=16))
    ref2 = reference_forward(x2, raw_params)
    assert jnp.allclose(out2, ref2, rtol=1e-4, atol=1e-3), (out2, ref2)

    # Default tb_max, 2-block split + padded rows (exercises the v7x-friendly tiling).
    x3 = jax.random.normal(k_x3, (37, FEAT), dtype=jnp.float32)
    out3 = jax.block_until_ready(neural_network_forward(x3, prepared))
    ref3 = reference_forward(x3, raw_params)
    assert jnp.allclose(out3, ref3, rtol=1e-4, atol=1e-3), (out3, ref3)

    print("KERNEL_OK")
</pallas_src>

<mosaic_0001>
module attributes {stable_mosaic.version = 11 : i64} {
  func.func @_kernel(%arg0: i32, %arg1: memref<8x8xf32, #tpu.memory_space<vmem>>, %arg2: memref<8x128xf32, #tpu.memory_space<vmem>>, %arg3: memref<1x128xf32, #tpu.memory_space<vmem>>, %arg4: memref<128x128xf32, #tpu.memory_space<vmem>>, %arg5: memref<1x128xf32, #tpu.memory_space<vmem>>, %arg6: memref<128x128xf32, #tpu.memory_space<vmem>>, %arg7: memref<1x128xf32, #tpu.memory_space<vmem>>, %arg8: memref<1x128xf32, #tpu.memory_space<vmem>>, %arg9: memref<1x8x128xf32, #tpu.memory_space<vmem>>) attributes {dimension_semantics = [#tpu.dimension_semantics<parallel>], iteration_bounds = array<i64: 1>, scalar_prefetch = 0 : i64, scratch_operands = 0 : i64, tpu.core_type = #tpu.core_type<tc>, window_params = [{transform_indices = @transform_0, window_bounds = array<i64: 8, 8>}, {pipeline_mode = #tpu.pipeline_mode<synchronous>, transform_indices = @transform_1, window_bounds = array<i64: 8, 128>}, {pipeline_mode = #tpu.pipeline_mode<synchronous>, transform_indices = @transform_2, window_bounds = array<i64: 1, 128>}, {pipeline_mode = #tpu.pipeline_mode<synchronous>, transform_indices = @transform_3, window_bounds = array<i64: 128, 128>}, {pipeline_mode = #tpu.pipeline_mode<synchronous>, transform_indices = @transform_4, window_bounds = array<i64: 1, 128>}, {pipeline_mode = #tpu.pipeline_mode<synchronous>, transform_indices = @transform_5, window_bounds = array<i64: 128, 128>}, {pipeline_mode = #tpu.pipeline_mode<synchronous>, transform_indices = @transform_6, window_bounds = array<i64: 1, 128>}, {pipeline_mode = #tpu.pipeline_mode<synchronous>, transform_indices = @transform_7, window_bounds = array<i64: 1, 128>}, {transform_indices = @transform_8, window_bounds = array<i64: 1, 8, 128>}]} {
    %c0 = arith.constant 0 : index
    %c0_0 = arith.constant 0 : index
    %0 = vector.load %arg1[%c0, %c0_0] : memref<8x8xf32, #tpu.memory_space<vmem>>, vector<8x8xf32>
    %c0_1 = arith.constant 0 : index
    %c0_2 = arith.constant 0 : index
    %1 = vector.load %arg2[%c0_1, %c0_2] : memref<8x128xf32, #tpu.memory_space<vmem>>, vector<8x128xf32>
    %cst = arith.constant dense<0.000000e+00> : vector<8x128xf32>
    %2 = tpu.matmul %0, %1, %cst {dimension_numbers = #tpu.dot_dimension_numbers<[1], [0], [0], [1], [0, 0, 1, 1], [], []>} : vector<8x8xf32>, vector<8x128xf32>, vector<8x128xf32> -> vector<8x128xf32>
    %c0_3 = arith.constant 0 : index
    %c0_4 = arith.constant 0 : index
    %3 = vector.load %arg3[%c0_3, %c0_4] : memref<1x128xf32, #tpu.memory_space<vmem>>, vector<1x128xf32>
    %4 = vector.broadcast %3 : vector<1x128xf32> to vector<8x128xf32>
    %5 = arith.addf %2, %4 : vector<8x128xf32>
    %cst_5 = arith.constant 2.000000e+01 : f32
    %6 = vector.broadcast %cst_5 : f32 to vector<8x128xf32>
    %7 = arith.cmpf ogt, %5, %6 : vector<8x128xf32>
    %cst_6 = arith.constant 2.000000e+01 : f32
    %8 = vector.broadcast %cst_6 : f32 to vector<8x128xf32>
    %9 = arith.minimumf %5, %8 : vector<8x128xf32>
    %10 = math.exp %9 : vector<8x128xf32>
    %11 = math.log1p %10 : vector<8x128xf32>
    %12 = arith.select %7, %5, %11 : vector<8x128xi1>, vector<8x128xf32>
    %cst_7 = arith.constant 2.000000e+01 : f32
    %13 = vector.broadcast %cst_7 : f32 to vector<8x128xf32>
    %14 = arith.cmpf ogt, %12, %13 : vector<8x128xf32>
    %cst_8 = arith.constant 2.000000e+01 : f32
    %15 = vector.broadcast %cst_8 : f32 to vector<8x128xf32>
    %16 = arith.minimumf %12, %15 : vector<8x128xf32>
    %17 = math.exp %16 : vector<8x128xf32>
    %18 = math.log1p %17 : vector<8x128xf32>
    %19 = arith.select %14, %12, %18 : vector<8x128xi1>, vector<8x128xf32>
    %c0_9 = arith.constant 0 : index
    %c0_10 = arith.constant 0 : index
    %20 = vector.load %arg4[%c0_9, %c0_10] : memref<128x128xf32, #tpu.memory_space<vmem>>, vector<128x128xf32>
    %cst_11 = arith.constant dense<0.000000e+00> : vector<8x128xf32>
    %21 = tpu.matmul %19, %20, %cst_11 {dimension_numbers = #tpu.dot_dimension_numbers<[1], [0], [0], [1], [0, 0, 1, 1], [], []>} : vector<8x128xf32>, vector<128x128xf32>, vector<8x128xf32> -> vector<8x128xf32>
    %c0_12 = arith.constant 0 : index
    %c0_13 = arith.constant 0 : index
    %22 = vector.load %arg5[%c0_12, %c0_13] : memref<1x128xf32, #tpu.memory_space<vmem>>, vector<1x128xf32>
    %23 = vector.broadcast %22 : vector<1x128xf32> to vector<8x128xf32>
    %24 = arith.addf %21, %23 : vector<8x128xf32>
    %25 = arith.addf %12, %24 : vector<8x128xf32>
    %cst_14 = arith.constant 2.000000e+01 : f32
    %26 = vector.broadcast %cst_14 : f32 to vector<8x128xf32>
    %27 = arith.cmpf ogt, %25, %26 : vector<8x128xf32>
    %cst_15 = arith.constant 2.000000e+01 : f32
    %28 = vector.broadcast %cst_15 : f32 to vector<8x128xf32>
    %29 = arith.minimumf %25, %28 : vector<8x128xf32>
    %30 = math.exp %29 : vector<8x128xf32>
    %31 = math.log1p %30 : vector<8x128xf32>
    %32 = arith.select %27, %25, %31 : vector<8x128xi1>, vector<8x128xf32>
    %c0_16 = arith.constant 0 : index
    %c0_17 = arith.constant 0 : index
    %33 = vector.load %arg6[%c0_16, %c0_17] : memref<128x128xf32, #tpu.memory_space<vmem>>, vector<128x128xf32>
    %cst_18 = arith.constant dense<0.000000e+00> : vector<8x128xf32>
    %34 = tpu.matmul %32, %33, %cst_18 {dimension_numbers = #tpu.dot_dimension_numbers<[1], [0], [0], [1], [0, 0, 1, 1], [], []>} : vector<8x128xf32>, vector<128x128xf32>, vector<8x128xf32> -> vector<8x128xf32>
    %c0_19 = arith.constant 0 : index
    %c0_20 = arith.constant 0 : index
    %35 = vector.load %arg7[%c0_19, %c0_20] : memref<1x128xf32, #tpu.memory_space<vmem>>, vector<1x128xf32>
    %36 = vector.broadcast %35 : vector<1x128xf32> to vector<8x128xf32>
    %37 = arith.addf %34, %36 : vector<8x128xf32>
    %38 = arith.addf %25, %37 : vector<8x128xf32>
    %c0_21 = arith.constant 0 : index
    %c0_22 = arith.constant 0 : index
    %39 = vector.load %arg8[%c0_21, %c0_22] : memref<1x128xf32, #tpu.memory_space<vmem>>, vector<1x128xf32>
    %40 = vector.broadcast %39 : vector<1x128xf32> to vector<8x128xf32>
    %41 = arith.mulf %38, %40 : vector<8x128xf32>
    %42 = vector.shape_cast %41 : vector<8x128xf32> to vector<1x8x128xf32>
    %cst_23 = arith.constant dense<0.000000e+00> : vector<1xf32>
    %43 = vector.multi_reduction <add>, %42, %cst_23 [1, 2] : vector<1x8x128xf32> to vector<1xf32>
    %44 = vector.shape_cast %43 : vector<1xf32> to vector<1x1x1xf32>
    %45 = vector.extract %44[0, 0, 0] : f32 from vector<1x1x1xf32>
    %46 = vector.broadcast %45 : f32 to vector<1x8x128xf32>
    %c0_24 = arith.constant 0 : index
    %c0_25 = arith.constant 0 : index
    %c0_26 = arith.constant 0 : index
    %47 = vector.load %arg9[%c0_24, %c0_25, %c0_26] : memref<1x8x128xf32, #tpu.memory_space<vmem>>, vector<1x8x128xf32>
    tpu.vector_store %arg9[%c0_24, %c0_25, %c0_26], %46 {strides = array<i32>} : memref<1x8x128xf32, #tpu.memory_space<vmem>>, vector<1x8x128xf32>,
    return
  }
  func.func @transform_0(%arg0: i32) -> (i32, i32) {
    %c0_i32 = arith.constant 0 : i32
    %c0_i32_0 = arith.constant 0 : i32
    return %arg0, %c0_i32 : i32, i32
  }
  func.func @transform_1(%arg0: i32) -> (i32, i32) {
    %c0_i32 = arith.constant 0 : i32
    %c0_i32_0 = arith.constant 0 : i32
    %c0_i32_1 = arith.constant 0 : i32
    return %c0_i32, %c0_i32_0 : i32, i32
  }
  func.func @transform_2(%arg0: i32) -> (i32, i32) {
    %c0_i32 = arith.constant 0 : i32
    %c0_i32_0 = arith.constant 0 : i32
    %c0_i32_1 = arith.constant 0 : i32
    return %c0_i32, %c0_i32_0 : i32, i32
  }
  func.func @transform_3(%arg0: i32) -> (i32, i32) {
    %c0_i32 = arith.constant 0 : i32
    %c0_i32_0 = arith.constant 0 : i32
    %c0_i32_1 = arith.constant 0 : i32
    return %c0_i32, %c0_i32_0 : i32, i32
  }
  func.func @transform_4(%arg0: i32) -> (i32, i32) {
    %c0_i32 = arith.constant 0 : i32
    %c0_i32_0 = arith.constant 0 : i32
    %c0_i32_1 = arith.constant 0 : i32
    return %c0_i32, %c0_i32_0 : i32, i32
  }
  func.func @transform_5(%arg0: i32) -> (i32, i32) {
    %c0_i32 = arith.constant 0 : i32
    %c0_i32_0 = arith.constant 0 : i32
    %c0_i32_1 = arith.constant 0 : i32
    return %c0_i32, %c0_i32_0 : i32, i32
  }
  func.func @transform_6(%arg0: i32) -> (i32, i32) {
    %c0_i32 = arith.constant 0 : i32
    %c0_i32_0 = arith.constant 0 : i32
    %c0_i32_1 = arith.constant 0 : i32
    return %c0_i32, %c0_i32_0 : i32, i32
  }
  func.func @transform_7(%arg0: i32) -> (i32, i32) {
    %c0_i32 = arith.constant 0 : i32
    %c0_i32_0 = arith.constant 0 : i32
    %c0_i32_1 = arith.constant 0 : i32
    return %c0_i32, %c0_i32_0 : i32, i32
  }
  func.func @transform_8(%arg0: i32) -> (i32, i32, i32) {
    %c0_i32 = arith.constant 0 : i32
    %c0_i32_0 = arith.constant 0 : i32
    %c0_i32_1 = arith.constant 0 : i32
    return %arg0, %c0_i32, %c0_i32_0 : i32, i32, i32
  }
}

</mosaic_0001>

<llo_original>
// kernel: tpu_custom_call.1
$region0: #{tpu_custom_call.1}
  #allocation0 [shape = 'u32[]', space=smem, size = 0x4, offset = 0x4, fixed_abs, tag = 'smem constant byte address 0x4 - core index']
  #allocation1 [shape = 'u32[144,128]{1,0:T(1,128)}', space=vmem, size = 0x12000, scoped, tag = 'internal scratch']
  %s0 = inlined_call_operand.hbm [shape: f32[8,8], index: 0, kind: input, shape index: {}]
  %s1 = inlined_call_operand.hbm [shape: f32[8,128], index: 1, kind: input, shape index: {}]
  %s2 = inlined_call_operand.vmem [shape: f32[1,128], index: 2, kind: input, shape index: {}]
  %s3 = inlined_call_operand.hbm [shape: f32[128,128], index: 3, kind: input, shape index: {}]
  %s4 = inlined_call_operand.vmem [shape: f32[1,128], index: 4, kind: input, shape index: {}]
  %s5 = inlined_call_operand.hbm [shape: f32[128,128], index: 5, kind: input, shape index: {}]
  %s6 = inlined_call_operand.vmem [shape: f32[1,128], index: 6, kind: input, shape index: {}]
  %s7 = inlined_call_operand.vmem [shape: f32[1,128], index: 7, kind: input, shape index: {}]
  %s8 = inlined_call_operand.hbm [shape: f32[1,8,128], index: 8, kind: output, shape index: {}]
  %s9 = sld [smem:[#allocation0]]
  $region58: #{tpu_custom_call.1} parent=0
    _
  %s11 = ssub.s32 1, %s9
  %s12 = scalar_select 0, %s11, %s9
  $region1: #{tpu_custom_call.1} parent=0
    #allocation2 [shape = 'u8[4096]{0}', space=vmem, size = 0x1000, scoped, tag = 'input window, operand 0, single buffered']
    #allocation3 [shape = 's32[1]{0}', space=sflag, size = 0x4, scoped, tag = 'scoped memory for tpu_custom_call.1']
    #allocation4 [shape = 's32[1]{0}', space=sflag, size = 0x4, scoped, tag = 'scoped memory for tpu_custom_call.1']
    #allocation5 [shape = 'u8[4096]{0}', space=vmem, size = 0x1000, scoped, tag = 'input window, operand 1, single buffered']
    #allocation6 [shape = 's32[1]{0}', space=sflag, size = 0x4, scoped, tag = 'scoped memory for tpu_custom_call.1']
    #allocation7 [shape = 'u8[65536]{0}', space=vmem, size = 0x10000, scoped, tag = 'input window, operand 3, single buffered']
    #allocation8 [shape = 'u8[65536]{0}', space=vmem, size = 0x10000, scoped, tag = 'input window, operand 5, single buffered']
    #allocation9 [shape = 's32[1]{0}', space=sflag, size = 0x4, scoped, tag = 'scoped memory for tpu_custom_call.1']
    #allocation10 [shape = 'u8[4096]{0}', space=vmem, size = 0x1000, scoped, tag = 'output window, operand 0, single buffered']
    %13 = vsyncpa [#allocation3], 0
    %14 = vsyncpa [#allocation6], 0
    %15 = vsyncpa [#allocation9], 0
    %16 = vsyncpa [#allocation4], 0
    // Predicated region
    $region2: #{tpu_custom_call.1} parent=1 // pred_check
      _
    $region3: #{tpu_custom_call.1} parent=1 // pred_check_branch
      %18 = sbr.rel (0) target = $region5
    $region4: #{tpu_custom_call.1} parent=1 // pred_region
      %s20 = ssub.s32 128, 128
      %21 = vsyncadd [#allocation3], %s20
      %s23 = sshll.u32 [#allocation2], 4
      %s24 = int_to_ptr.vmem [resolvable:$true] %s23
      %26 = dma.hbm_to_vmem [thread:$0]  %s0, 128, %s24, [#allocation3]
    $region5: #{tpu_custom_call.1} parent=1 // pred_fallthru
      _
    // Predicated region
    $region6: #{tpu_custom_call.1} parent=1 // pred_check
      _
    $region7: #{tpu_custom_call.1} parent=1 // pred_check_branch
      %28 = sbr.rel (0) target = $region9
    $region8: #{tpu_custom_call.1} parent=1 // pred_region
      %s30 = ssub.s32 128, 128
      %31 = vsyncadd [#allocation6], %s30
      %s33 = sshll.u32 [#allocation5], 4
      %s34 = int_to_ptr.vmem [resolvable:$true] %s33
      %36 = dma.hbm_to_vmem [thread:$0]  %s1, 128, %s34, [#allocation6]
    $region9: #{tpu_custom_call.1} parent=1 // pred_fallthru
      _
    // Predicated region
    $region10: #{tpu_custom_call.1} parent=1 // pred_check
      _
    $region11: #{tpu_custom_call.1} parent=1 // pred_check_branch
      %38 = sbr.rel (0) target = $region13
    $region12: #{tpu_custom_call.1} parent=1 // pred_region
      _
    $region13: #{tpu_custom_call.1} parent=1 // pred_fallthru
      _
    // Predicated region
    $region14: #{tpu_custom_call.1} parent=1 // pred_check
      _
    $region15: #{tpu_custom_call.1} parent=1 // pred_check_branch
      %40 = sbr.rel (0) target = $region17
    $region16: #{tpu_custom_call.1} parent=1 // pred_region
      %s42 = ssub.s32 2048, 2048
      %43 = vsyncadd [#allocation6], %s42
      %s44 = sshll.u32 [#allocation7], 4
      %s45 = int_to_ptr.vmem [resolvable:$true] %s44
      %50 = dma.hbm_to_vmem [thread:$0]  %s3, 2048, %s45, [#allocation6], 128, 128, 8
    $region17: #{tpu_custom_call.1} parent=1 // pred_fallthru
      _
    // Predicated region
    $region18: #{tpu_custom_call.1} parent=1 // pred_check
      _
    $region19: #{tpu_custom_call.1} parent=1 // pred_check_branch
      %52 = sbr.rel (0) target = $region21
    $region20: #{tpu_custom_call.1} parent=1 // pred_region
      _
    $region21: #{tpu_custom_call.1} parent=1 // pred_fallthru
      _
    // Predicated region
    $region22: #{tpu_custom_call.1} parent=1 // pred_check
      _
    $region23: #{tpu_custom_call.1} parent=1 // pred_check_branch
      %54 = sbr.rel (0) target = $region25
    $region24: #{tpu_custom_call.1} parent=1 // pred_region
      %s56 = ssub.s32 2048, 2048
      %57 = vsyncadd [#allocation9], %s56
      %s58 = sshll.u32 [#allocation8], 4
      %s59 = int_to_ptr.vmem [resolvable:$true] %s58
      %64 = dma.hbm_to_vmem [thread:$0]  %s5, 2048, %s59, [#allocation9], 128, 128, 8
    $region25: #{tpu_custom_call.1} parent=1 // pred_fallthru
      _
    // Predicated region
    $region26: #{tpu_custom_call.1} parent=1 // pred_check
      _
    $region27: #{tpu_custom_call.1} parent=1 // pred_check_branch
      %66 = sbr.rel (0) target = $region29
    $region28: #{tpu_custom_call.1} parent=1 // pred_region
      _
    $region29: #{tpu_custom_call.1} parent=1 // pred_fallthru
      _
    // Predicated region
    $region30: #{tpu_custom_call.1} parent=1 // pred_check
      _
    $region31: #{tpu_custom_call.1} parent=1 // pred_check_branch
      %68 = sbr.rel (0) target = $region33
    $region32: #{tpu_custom_call.1} parent=1 // pred_region
      _
    $region33: #{tpu_custom_call.1} parent=1 // pred_fallthru
      _
    // Predicated region
    $region34: #{tpu_custom_call.1} parent=1 // pred_check
      _
    $region35: #{tpu_custom_call.1} parent=1 // pred_check_branch
      %70 = sbr.rel (0) target = $region37
    $region36: #{tpu_custom_call.1} parent=1 // pred_region
      %71 = dma.done [#allocation3], 128
    $region37: #{tpu_custom_call.1} parent=1 // pred_fallthru
      _
    // Predicated region
    $region38: #{tpu_custom_call.1} parent=1 // pred_check
      _
    $region39: #{tpu_custom_call.1} parent=1 // pred_check_branch
      %73 = sbr.rel (0) target = $region41
    $region40: #{tpu_custom_call.1} parent=1 // pred_region
      %74 = dma.done [#allocation6], 128
    $region41: #{tpu_custom_call.1} parent=1 // pred_fallthru
      _
    // Predicated region
    $region42: #{tpu_custom_call.1} parent=1 // pred_check
      _
    $region43: #{tpu_custom_call.1} parent=1 // pred_check_branch
      %76 = sbr.rel (0) target = $region45
    $region44: #{tpu_custom_call.1} parent=1 // pred_region
      %77 = dma.done [#allocation6], 2048
    $region45: #{tpu_custom_call.1} parent=1 // pred_fallthru
      _
    // Predicated region
    $region46: #{tpu_custom_call.1} parent=1 // pred_check
      _
    $region47: #{tpu_custom_call.1} parent=1 // pred_check_branch
      %79 = sbr.rel (0) target = $region49
    $region48: #{tpu_custom_call.1} parent=1 // pred_region
      %80 = dma.done [#allocation9], 2048
    $region49: #{tpu_custom_call.1} parent=1 // pred_fallthru
      _
    %v81 = vld [vmem:[#allocation2] sm:$0xff]
    %v82 = vld [vmem:[#allocation5] sm:$0xff]
    %v83 = vld [vmem:[%s2] sm:$0x1]
    %v85 = vlaneseq
    %v86 = vshrl.u32 %v85, 7
    %v87 = vsub.s32 0, %v86
    %v88 = vrot.slane %v83, %v87
    %vm90 = vcmask 64512
    %v92 = vsel %vm90, %v81, 0
    %94 = vmatprep.subr.mxu0 0.0
    %95 = vmatpush1.msra.mxu0 0.0
    %96 = vmatprep.subr.mxu0 0.0
    %97 = vmatpush1.msra.mxu0 0.0
    %98 = vmatprep.subr.mxu0 0.0
    %99 = vmatpush1.msra.mxu0 0.0
    %100 = vmatprep.subr.mxu0 0.0
    %101 = vmatpush1.msra.mxu0 0.0
    %102 = vmatprep.subr.mxu0 0.0
    %103 = vmatpush1.msra.mxu0 0.0
    %104 = vmatprep.subr.mxu0 0.0
    %105 = vmatpush1.msra.mxu0 0.0
    %106 = vmatprep.subr.mxu0 0.0
    %107 = vmatpush1.msra.mxu0 0.0
    %108 = vmatprep.subr.mxu0 0.0
    %109 = vmatpush1.msra.mxu0 0.0
    %110 = vmatprep.subr.mxu0 0.0
    %111 = vmatpush1.msra.mxu0 0.0
    %112 = vmatprep.subr.mxu0 0.0
    %113 = vmatpush1.msra.mxu0 0.0
    %114 = vmatprep.subr.mxu0 0.0
    %115 = vmatpush1.msra.mxu0 0.0
    %116 = vmatprep.subr.mxu0 0.0
    %117 = vmatpush1.msra.mxu0 0.0
    %118 = vmatprep.subr.mxu0 0.0
    %119 = vmatpush1.msra.mxu0 0.0
    %120 = vmatprep.subr.mxu0 0.0
    %121 = vmatpush1.msra.mxu0 0.0
    %122 = vmatprep.subr.mxu0 0.0
    %123 = vmatpush1.msra.mxu0 0.0
    %124 = vmatprep.subr.mxu0 0.0
    %125 = vmatpush1.msra.mxu0 %v82
    %126 = vmatprep.subr.mxu0 0.0
    %127 = vmatpush2.msra.mxu0 0.0
    %128 = vmatprep.subr.mxu0 0.0
    %129 = vmatpush2.msra.mxu0 0.0
    %130 = vmatprep.subr.mxu0 0.0
    %131 = vmatpush2.msra.mxu0 0.0
    %132 = vmatprep.subr.mxu0 0.0
    %133 = vmatpush2.msra.mxu0 0.0
    %134 = vmatprep.subr.mxu0 0.0
    %135 = vmatpush2.msra.mxu0 0.0
    %136 = vmatprep.subr.mxu0 0.0
    %137 = vmatpush2.msra.mxu0 0.0
    %138 = vmatprep.subr.mxu0 0.0
    %139 = vmatpush2.msra.mxu0 0.0
    %140 = vmatprep.subr.mxu0 0.0
    %141 = vmatpush2.msra.mxu0 0.0
    %142 = vmatprep.subr.mxu0 0.0
    %143 = vmatpush2.msra.mxu0 0.0
    %144 = vmatprep.subr.mxu0 0.0
    %145 = vmatpush2.msra.mxu0 0.0
    %146 = vmatprep.subr.mxu0 0.0
    %147 = vmatpush2.msra.mxu0 0.0
    %148 = vmatprep.subr.mxu0 0.0
    %149 = vmatpush2.msra.mxu0 0.0
    %150 = vmatprep.subr.mxu0 0.0
    %151 = vmatpush2.msra.mxu0 0.0
    %152 = vmatprep.subr.mxu0 0.0
    %153 = vmatpush2.msra.mxu0 0.0
    %154 = vmatprep.subr.mxu0 0.0
    %155 = vmatpush2.msra.mxu0 0.0
    %156 = vmatprep.subr.mxu0 0.0
    %157 = vmatpush2.msra.mxu0 0.0
    %158 = vmatprep.mubr.f32.mxu0 0.0
    %159 = vmatmul.mubr.f32.gmra.mxu0 %v92
    %v160 = vpop.f32.mrf.mxu0
    %v161 = vadd.f32 %v88, %v160
    %v162 = vpop.f32.mrf.mxu0
    %163 = vdwg.mxu0
    %vm164 = vcmp.gt.f32.partialorder %v161, 20.0
    %v165 = vmin.f32 %v161, 20.0
    %v166 = vmul.f32 %v165, 1.442695
    %v167 = vpow.pop %v166
    %v168 = vadd.f32 %v167, 1.0
    %v169 = vlog2.pop %v168
    %v170 = vmul.f32 %v169, 0.6931472
    %v171 = vmul.f32 -0.5, %v167
    %v172 = vadd.f32 %v171, 1.0
    %v173 = vmul.f32 %v172, %v167
    %v174 = vand.u32 2147483647, %v167
    %vm175 = vcmp.lt.f32.partialorder %v174, 0.0004427343
    %v176 = vsel %vm175, %v173, %v170
    %v177 = vsel %vm164, %v161, %v176
    %vm178 = vcmp.gt.f32.partialorder %v177, 20.0
    %v179 = vmin.f32 %v177, 20.0
    %v180 = vmul.f32 %v179, 1.442695
    %v181 = vpow.pop %v180
    %v182 = vadd.f32 %v181, 1.0
    %v183 = vlog2.pop %v182
    %v184 = vmul.f32 %v183, 0.6931472
    %v185 = vmul.f32 -0.5, %v181
    %v186 = vadd.f32 %v185, 1.0
    %v187 = vmul.f32 %v186, %v181
    %v188 = vand.u32 2147483647, %v181
    %vm189 = vcmp.lt.f32.partialorder %v188, 0.0004427343
    %v190 = vsel %vm189, %v187, %v184
    %v191 = vsel %vm178, %v177, %v190
    %v192 = vld [vmem:[#allocation7] sm:$0xff]
    %v193 = vld [vmem:[#allocation7 + $0x8] sm:$0xff]
    %v194 = vld [vmem:[#allocation7 + $0x10] sm:$0xff]
    %v195 = vld [vmem:[#allocation7 + $0x18] sm:$0xff]
    %v196 = vld [vmem:[#allocation7 + $0x20] sm:$0xff]
    %v197 = vld [vmem:[#allocation7 + $0x28] sm:$0xff]
    %v198 = vld [vmem:[#allocation7 + $0x30] sm:$0xff]
    %v199 = vld [vmem:[#allocation7 + $0x38] sm:$0xff]
    %v200 = vld [vmem:[#allocation7 + $0x40] sm:$0xff]
    %v201 = vld [vmem:[#allocation7 + $0x48] sm:$0xff]
    %v202 = vld [vmem:[#allocation7 + $0x50] sm:$0xff]
    %v203 = vld [vmem:[#allocation7 + $0x58] sm:$0xff]
    %v204 = vld [vmem:[#allocation7 + $0x60] sm:$0xff]
    %v205 = vld [vmem:[#allocation7 + $0x68] sm:$0xff]
    %v206 = vld [vmem:[#allocation7 + $0x70] sm:$0xff]
    %v207 = vld [vmem:[#allocation7 + $0x78] sm:$0xff]
    %v208 = vld [vmem:[%s4] sm:$0x1]
    %v210 = vlaneseq
    %v211 = vshrl.u32 %v210, 7
    %v212 = vsub.s32 0, %v211
    %v213 = vrot.slane %v208, %v212
    %215 = vmatprep.subr.mxu0 0.0
    %216 = vmatpush1.msra.mxu0 %v207
    %217 = vmatprep.subr.mxu0 0.0
    %218 = vmatpush1.msra.mxu0 %v206
    %219 = vmatprep.subr.mxu0 0.0
    %220 = vmatpush1.msra.mxu0 %v205
    %221 = vmatprep.subr.mxu0 0.0
    %222 = vmatpush1.msra.mxu0 %v204
    %223 = vmatprep.subr.mxu0 0.0
    %224 = vmatpush1.msra.mxu0 %v203
    %225 = vmatprep.subr.mxu0 0.0
    %226 = vmatpush1.msra.mxu0 %v202
    %227 = vmatprep.subr.mxu0 0.0
    %228 = vmatpush1.msra.mxu0 %v201
    %229 = vmatprep.subr.mxu0 0.0
    %230 = vmatpush1.msra.mxu0 %v200
    %231 = vmatprep.subr.mxu0 0.0
    %232 = vmatpush1.msra.mxu0 %v199
    %233 = vmatprep.subr.mxu0 0.0
    %234 = vmatpush1.msra.mxu0 %v198
    %235 = vmatprep.subr.mxu0 0.0
    %236 = vmatpush1.msra.mxu0 %v197
    %237 = vmatprep.subr.mxu0 0.0
    %238 = vmatpush1.msra.mxu0 %v196
    %239 = vmatprep.subr.mxu0 0.0
    %240 = vmatpush1.msra.mxu0 %v195
    %241 = vmatprep.subr.mxu0 0.0
    %242 = vmatpush1.msra.mxu0 %v194
    %243 = vmatprep.subr.mxu0 0.0
    %244 = vmatpush1.msra.mxu0 %v193
    %245 = vmatprep.subr.mxu0 0.0
    %246 = vmatpush1.msra.mxu0 %v192
    %247 = vmatprep.subr.mxu0 0.0
    %248 = vmatpush2.msra.mxu0 0.0
    %249 = vmatprep.subr.mxu0 0.0
    %250 = vmatpush2.msra.mxu0 0.0
    %251 = vmatprep.subr.mxu0 0.0
    %252 = vmatpush2.msra.mxu0 0.0
    %253 = vmatprep.subr.mxu0 0.0
    %254 = vmatpush2.msra.mxu0 0.0
    %255 = vmatprep.subr.mxu0 0.0
    %256 = vmatpush2.msra.mxu0 0.0
    %257 = vmatprep.subr.mxu0 0.0
    %258 = vmatpush2.msra.mxu0 0.0
    %259 = vmatprep.subr.mxu0 0.0
    %260 = vmatpush2.msra.mxu0 0.0
    %261 = vmatprep.subr.mxu0 0.0
    %262 = vmatpush2.msra.mxu0 0.0
    %263 = vmatprep.subr.mxu0 0.0
    %264 = vmatpush2.msra.mxu0 0.0
    %265 = vmatprep.subr.mxu0 0.0
    %266 = vmatpush2.msra.mxu0 0.0
    %267 = vmatprep.subr.mxu0 0.0
    %268 = vmatpush2.msra.mxu0 0.0
    %269 = vmatprep.subr.mxu0 0.0
    %270 = vmatpush2.msra.mxu0 0.0
    %271 = vmatprep.subr.mxu0 0.0
    %272 = vmatpush2.msra.mxu0 0.0
    %273 = vmatprep.subr.mxu0 0.0
    %274 = vmatpush2.msra.mxu0 0.0
    %275 = vmatprep.subr.mxu0 0.0
    %276 = vmatpush2.msra.mxu0 0.0
    %277 = vmatprep.subr.mxu0 0.0
    %278 = vmatpush2.msra.mxu0 0.0
    %279 = vmatprep.mubr.f32.mxu0 0.0
    %280 = vmatmul.mubr.f32.gmra.mxu0 %v191
    %v281 = vpop.f32.mrf.mxu0
    %v282 = vadd.f32 %v213, %v281
    %v283 = vpop.f32.mrf.mxu0
    %284 = vdwg.mxu0
    %v285 = vadd.f32 %v177, %v282
    %vm286 = vcmp.gt.f32.partialorder %v285, 20.0
    %v287 = vmin.f32 %v285, 20.0
    %v288 = vmul.f32 %v287, 1.442695
    %v289 = vpow.pop %v288
    %v290 = vadd.f32 %v289, 1.0
    %v291 = vlog2.pop %v290
    %v292 = vmul.f32 %v291, 0.6931472
    %v293 = vmul.f32 -0.5, %v289
    %v294 = vadd.f32 %v293, 1.0
    %v295 = vmul.f32 %v294, %v289
    %v296 = vand.u32 2147483647, %v289
    %vm297 = vcmp.lt.f32.partialorder %v296, 0.0004427343
    %v298 = vsel %vm297, %v295, %v292
    %v299 = vsel %vm286, %v285, %v298
    %v300 = vld [vmem:[#allocation8] sm:$0xff]
    %v301 = vld [vmem:[#allocation8 + $0x8] sm:$0xff]
    %v302 = vld [vmem:[#allocation8 + $0x10] sm:$0xff]
    %v303 = vld [vmem:[#allocation8 + $0x18] sm:$0xff]
    %v304 = vld [vmem:[#allocation8 + $0x20] sm:$0xff]
    %v305 = vld [vmem:[#allocation8 + $0x28] sm:$0xff]
    %v306 = vld [vmem:[#allocation8 + $0x30] sm:$0xff]
    %v307 = vld [vmem:[#allocation8 + $0x38] sm:$0xff]
    %v308 = vld [vmem:[#allocation8 + $0x40] sm:$0xff]
    %v309 = vld [vmem:[#allocation8 + $0x48] sm:$0xff]
    %v310 = vld [vmem:[#allocation8 + $0x50] sm:$0xff]
    %v311 = vld [vmem:[#allocation8 + $0x58] sm:$0xff]
    %v312 = vld [vmem:[#allocation8 + $0x60] sm:$0xff]
    %v313 = vld [vmem:[#allocation8 + $0x68] sm:$0xff]
    %v314 = vld [vmem:[#allocation8 + $0x70] sm:$0xff]
    %v315 = vld [vmem:[#allocation8 + $0x78] sm:$0xff]
    %v316 = vld [vmem:[%s6] sm:$0x1]
    %v318 = vlaneseq
    %v319 = vshrl.u32 %v318, 7
    %v320 = vsub.s32 0, %v319
    %v321 = vrot.slane %v316, %v320
    %323 = vmatprep.subr.mxu0 0.0
    %324 = vmatpush1.msra.mxu0 %v315
    %325 = vmatprep.subr.mxu0 0.0
    %326 = vmatpush1.msra.mxu0 %v314
    %327 = vmatprep.subr.mxu0 0.0
    %328 = vmatpush1.msra.mxu0 %v313
    %329 = vmatprep.subr.mxu0 0.0
    %330 = vmatpush1.msra.mxu0 %v312
    %331 = vmatprep.subr.mxu0 0.0
    %332 = vmatpush1.msra.mxu0 %v311
    %333 = vmatprep.subr.mxu0 0.0
    %334 = vmatpush1.msra.mxu0 %v310
    %335 = vmatprep.subr.mxu0 0.0
    %336 = vmatpush1.msra.mxu0 %v309
    %337 = vmatprep.subr.mxu0 0.0
    %338 = vmatpush1.msra.mxu0 %v308
    %339 = vmatprep.subr.mxu0 0.0
    %340 = vmatpush1.msra.mxu0 %v307
    %341 = vmatprep.subr.mxu0 0.0
    %342 = vmatpush1.msra.mxu0 %v306
    %343 = vmatprep.subr.mxu0 0.0
    %344 = vmatpush1.msra.mxu0 %v305
    %345 = vmatprep.subr.mxu0 0.0
    %346 = vmatpush1.msra.mxu0 %v304
    %347 = vmatprep.subr.mxu0 0.0
    %348 = vmatpush1.msra.mxu0 %v303
    %349 = vmatprep.subr.mxu0 0.0
    %350 = vmatpush1.msra.mxu0 %v302
    %351 = vmatprep.subr.mxu0 0.0
    %352 = vmatpush1.msra.mxu0 %v301
    %353 = vmatprep.subr.mxu0 0.0
    %354 = vmatpush1.msra.mxu0 %v300
    %355 = vmatprep.subr.mxu0 0.0
    %356 = vmatpush2.msra.mxu0 0.0
    %357 = vmatprep.subr.mxu0 0.0
    %358 = vmatpush2.msra.mxu0 0.0
    %359 = vmatprep.subr.mxu0 0.0
    %360 = vmatpush2.msra.mxu0 0.0
    %361 = vmatprep.subr.mxu0 0.0
    %362 = vmatpush2.msra.mxu0 0.0
    %363 = vmatprep.subr.mxu0 0.0
    %364 = vmatpush2.msra.mxu0 0.0
    %365 = vmatprep.subr.mxu0 0.0
    %366 = vmatpush2.msra.mxu0 0.0
    %367 = vmatprep.subr.mxu0 0.0
    %368 = vmatpush2.msra.mxu0 0.0
    %369 = vmatprep.subr.mxu0 0.0
    %370 = vmatpush2.msra.mxu0 0.0
    %371 = vmatprep.subr.mxu0 0.0
    %372 = vmatpush2.msra.mxu0 0.0
    %373 = vmatprep.subr.mxu0 0.0
    %374 = vmatpush2.msra.mxu0 0.0
    %375 = vmatprep.subr.mxu0 0.0
    %376 = vmatpush2.msra.mxu0 0.0
    %377 = vmatprep.subr.mxu0 0.0
    %378 = vmatpush2.msra.mxu0 0.0
    %379 = vmatprep.subr.mxu0 0.0
    %380 = vmatpush2.msra.mxu0 0.0
    %381 = vmatprep.subr.mxu0 0.0
    %382 = vmatpush2.msra.mxu0 0.0
    %383 = vmatprep.subr.mxu0 0.0
    %384 = vmatpush2.msra.mxu0 0.0
    %385 = vmatprep.subr.mxu0 0.0
    %386 = vmatpush2.msra.mxu0 0.0
    %387 = vmatprep.mubr.f32.mxu0 0.0
    %388 = vmatmul.mubr.f32.gmra.mxu0 %v299
    %v389 = vpop.f32.mrf.mxu0
    %v390 = vadd.f32 %v321, %v389
    %v391 = vpop.f32.mrf.mxu0
    %392 = vdwg.mxu0
    %v393 = vadd.f32 %v285, %v390
    %v394 = vld [vmem:[%s7] sm:$0x1]
    %v396 = vlaneseq
    %v397 = vshrl.u32 %v396, 7
    %v398 = vsub.s32 0, %v397
    %v399 = vrot.slane %v394, %v398
    %v401 = vmul.f32 %v393, %v399
    %402 = vadd.xlane.f32.xlu0 %v401
    %v403 = vpop.xlane.xlu0 %402
    %v404 = vrot.slane %v403, 4
    %v405 = vadd.f32 %v403, %v404
    %v406 = vrot.slane %v405, 2
    %v407 = vadd.f32 %v405, %v406
    %v408 = vrot.slane %v407, 1
    %v409 = vadd.f32 %v407, %v408
    %s410 = vtos %v409
    %v411 = vstv %s410
    %412 = vst [vmem:[#allocation10] sm:$0xff] %v411
    // Predicated region
    $region50: #{tpu_custom_call.1} parent=1 // pred_check
      _
    $region51: #{tpu_custom_call.1} parent=1 // pred_check_branch
      %414 = sbr.rel (0) target = $region53
    $region52: #{tpu_custom_call.1} parent=1 // pred_region
      %s416 = ssub.s32 128, 128
      %417 = vsyncadd [#allocation4], %s416
      %s419 = sshll.u32 [#allocation10], 4
      %s420 = int_to_ptr.vmem [resolvable:$true] %s419
      %422 = dma.vmem_to_hbm [thread:$0]  %s420, 128, %s8, [#allocation4]
    $region53: #{tpu_custom_call.1} parent=1 // pred_fallthru
      _
    // Predicated region
    $region54: #{tpu_custom_call.1} parent=1 // pred_check
      _
    $region55: #{tpu_custom_call.1} parent=1 // pred_check_branch
      %424 = sbr.rel (0) target = $region57
    $region56: #{tpu_custom_call.1} parent=1 // pred_region
      %425 = dma.done [#allocation4], 128
    $region57: #{tpu_custom_call.1} parent=1 // pred_fallthru
      _
    %426 = vsyncpa [#allocation3], 1
    %427 = vsyncpa [#allocation6], 1
    %428 = vsyncpa [#allocation9], 1
    %429 = vsyncpa [#allocation4], 1

</llo_original>
